<compile_context>
chip_gen: v7x
topology: tpu7x:2x2x1
jax: 0.10.0
libtpu: 0.0.40
codegen_flags: <defaults>
</compile_context>

<pallas_src>
import math

import jax
import jax.numpy as jnp
from jax.experimental import pallas as pl
from jax.experimental.pallas import tpu as pltpu


def _round_up(x, m):
    return ((x + m - 1) // m) * m


def _vmem_info():
    """(physical VMEM capacity, per-call scratch budget) for this generation."""
    cap = 64 << 20                                  # conservative fallback (v7x)
    try:
        cap = int(pltpu.get_tpu_info().vmem_capacity_bytes)
    except Exception:
        pass
    budget = min(96 << 20, max(24 << 20, int(cap * 0.55)))
    return cap, budget


def _pick_tl(L, cap):
    """Length-tile: full L if it fits, else largest 128-multiple dividing L,
    else pad."""
    cap = max(128, (cap // 128) * 128)
    if L <= cap:
        return L, L                                  # full length, no padding
    for cand in range(cap, 127, -128):
        if L % cand == 0:
            return cand, L
    return cap, _round_up(L, cap)


def _make_kernel(*, n_k, w_resident, use_scratch, compute_dtype):
    cdt = jnp.dtype(compute_dtype)

    def kernel(x_ref, w_ref, b_ref, o_ref, *scratch):
        # x_ref: (1, tk, tl)          b_ref: (tv, 1) f32
        # w_ref: (n_v, n_k, tv, tk) resident  |  (tv, tk) streamed
        # o_ref: (1, tv, tl)          scratch: [(tv, tl) f32] iff use_scratch
        v = pl.program_id(2)
        k = pl.program_id(3)

        w = w_ref[v, k] if w_resident else w_ref[...]
        x = x_ref[0]
        if x.dtype != cdt:
            x = x.astype(cdt)
        if w.dtype != cdt:
            w = w.astype(cdt)

        part = jnp.dot(w, x, preferred_element_type=jnp.float32)

        if n_k == 1:
            # Single reduction step: no accumulator, single lane-dense store.
            o_ref[0] = (part + b_ref[...]).astype(o_ref.dtype)
        elif not use_scratch:
            # f32 output: accumulate directly into the resident output tile
            # (its block index is independent of k); bias folded into init.
            @pl.when(k == 0)
            def _init():
                o_ref[0] = part + b_ref[...]

            @pl.when(k > 0)
            def _acc():
                o_ref[0] = o_ref[0] + part
        else:
            acc_ref = scratch[0]

            @pl.when(k == 0)
            def _init():
                acc_ref[...] = part + b_ref[...]

            @pl.when(k > 0)
            def _acc():
                acc_ref[...] = acc_ref[...] + part

            @pl.when(k == n_k - 1)
            def _store():
                o_ref[0] = acc_ref[...].astype(o_ref.dtype)

    return kernel


def transposed_linear(x, weight, bias=None, *,
                      block_v=None, block_l=None, block_k=None,
                      compute_dtype=jnp.bfloat16,
                      max_resident_weight_bytes=None):
    """out[..., v, l] = sum_u weight[v, u] * x[..., u, l] + bias[v, 0].

    x: (..., U, L); weight: (V, U); bias: (V, 1), scalar, or None.
    Returns (..., V, L) in x.dtype.
    """
    V, U_w = weight.shape
    *lead, U, L = x.shape
    assert U == U_w, (U, U_w)
    B = math.prod(lead) if lead else 1
    xb = x.reshape(B, U, L)

    out_dtype = jnp.dtype(x.dtype)
    out_is_f32 = out_dtype == jnp.dtype(jnp.float32)
    cdt = jnp.dtype(compute_dtype) if compute_dtype is not None else out_dtype

    x_it = jnp.dtype(x.dtype).itemsize
    w_it = cdt.itemsize
    o_it = out_dtype.itemsize

    vmem_cap, budget = _vmem_info()

    # ---- K (reduction / d_input) tiling: prefer a single whole-U step ----
    if block_k is not None:
        tk = min(_round_up(max(block_k, 1), 128), _round_up(U, 128))
    elif U <= 2048:
        tk = U                                    # whole reduction, no U pad
    else:
        tk = 2048
    U_p = U if tk == U else _round_up(U, tk)
    n_k = U_p // tk

    # ---- L (length) tiling ----
    if block_l is not None:
        tl = min(_round_up(max(block_l, 1), 128), _round_up(L, 128))
        L_p = _round_up(L, tl)
    else:
        tl, L_p = _pick_tl(L, 2048)
    n_l = L_p // tl

    # ---- V (d_output) tiling: tv always a multiple of 16 (bf16 packing) ----
    if block_v is not None:
        tv = min(_round_up(max(block_v, 1), 16), _round_up(V, 16))
    else:
        tv = min(512, _round_up(V, 16))
    V_p = _round_up(V, tv)
    n_v = V_p // tv

    if max_resident_weight_bytes is None:
        max_resident_weight_bytes = min(16 << 20, budget // 3)
    w_resident = (2 * V_p * U_p * w_it) <= max_resident_weight_bytes

    def _use_scratch():
        return (n_k > 1) and (not out_is_f32)

    def _footprint():
        f = 2 * tk * tl * x_it                    # x tile, double-buffered
        f += 2 * tv * 128 * 4                     # bias tile (lane-padded)
        f += 2 * tv * tl * o_it                   # output tile, double-buffered
        f += (2 * V_p * U_p * w_it) if w_resident else (2 * tv * tk * w_it)
        if _use_scratch():
            f += tv * tl * 4                      # f32 accumulator scratch
        return f

    # Shrink tiles until the footprint fits the per-generation VMEM budget.
    for _ in range(64):
        if _footprint() <= budget:
            break
        if tl > 128 and tl >= tv:
            tl = max(128, ((tl // 2) // 128) * 128)
            L_p = _round_up(L, tl); n_l = L_p // tl
        elif tv > 16:
            tv = max(16, _round_up(tv // 2, 16))
            V_p = _round_up(V, tv); n_v = V_p // tv
        elif n_k > 1 and tk > 128:
            tk = max(128, ((tk // 2) // 128) * 128)
            U_p = _round_up(U, tk); n_k = U_p // tk
        elif w_resident:
            w_resident = False
        else:
            break

    # v7x has 2 TensorCores: make sure there are >= 2 parallel blocks.
    if B * n_l * n_v < 2 and V_p >= 32 and tv >= 32:
        tv = max(16, _round_up(tv // 2, 16))
        V_p = _round_up(V, tv); n_v = V_p // tv

    use_scratch = _use_scratch()

    # ---- operand preparation (pad only when unavoidable; otherwise the
    # kernel casts x tiles in VMEM, saving a full HBM pad/cast pass) ----
    if (U_p, L_p) != (U, L):
        x_in = jnp.pad(xb.astype(cdt), ((0, 0), (0, U_p - U), (0, L_p - L)))
    else:
        x_in = xb

    w_in = weight.astype(cdt)
    if (V_p, U_p) != (V, U):
        w_in = jnp.pad(w_in, ((0, V_p - V), (0, U_p - U)))

    if bias is None:
        b_arr = jnp.zeros((V, 1), jnp.float32)
    elif jnp.ndim(bias) == 0:
        b_arr = jnp.full((V, 1), bias, jnp.float32)
    else:
        b_arr = jnp.asarray(bias, jnp.float32).reshape(V, 1)
    if V_p != V:
        b_arr = jnp.pad(b_arr, ((0, V_p - V), (0, 0)))

    if w_resident:
        # (n_v, n_k, tv, tk): whole weight stays resident in VMEM (constant
        # block index -> DMA'd once); kernel picks the (v, k) tile by
        # leading-axis indexing.
        w_in = w_in.reshape(n_v, tv, n_k, tk).transpose(0, 2, 1, 3)
        w_spec = pl.BlockSpec((n_v, n_k, tv, tk), lambda b, l, v, k: (0, 0, 0, 0))
    else:
        w_spec = pl.BlockSpec((tv, tk), lambda b, l, v, k: (v, k))

    kernel = _make_kernel(n_k=n_k, w_resident=w_resident,
                          use_scratch=use_scratch, compute_dtype=cdt)

    vmem_limit = int(min(max(_footprint() * 5 // 4, 16 << 20) + (4 << 20),
                         (vmem_cap * 9) // 10))

    grid = (B, n_l, n_v, n_k)
    out_p = pl.pallas_call(
        kernel,
        out_shape=jax.ShapeDtypeStruct((B, V_p, L_p), out_dtype),
        grid_spec=pltpu.PrefetchScalarGridSpec(
            num_scalar_prefetch=0,
            grid=grid,
            in_specs=[
                # x block index is independent of v: with n_k == 1 each x tile
                # is fetched once per (b, l) and reused across all V tiles.
                pl.BlockSpec((1, tk, tl), lambda b, l, v, k: (b, k, l)),
                w_spec,
                pl.BlockSpec((tv, 1), lambda b, l, v, k: (v, 0)),
            ],
            out_specs=pl.BlockSpec((1, tv, tl), lambda b, l, v, k: (b, v, l)),
            scratch_shapes=([pltpu.VMEM((tv, tl), jnp.float32)]
                            if use_scratch else []),
        ),
        compiler_params=pltpu.CompilerParams(
            dimension_semantics=("parallel", "parallel", "parallel",
                                 "arbitrary"),
            vmem_limit_bytes=vmem_limit,
        ),
    )(x_in, w_in, b_arr)

    out = out_p[:, :V, :L] if (V_p, L_p) != (V, L) else out_p
    return out.reshape(tuple(lead) + (V, L))


def init_params(key, d_input, d_output, dtype=jnp.float32):
    """Matches the PyTorch module init: kaiming_uniform_(a=sqrt(5)) on weight
    (bound = 1/sqrt(fan_in) = 1/sqrt(d_input)); bias uniform in same bound."""
    kw, kb = jax.random.split(key)
    bound = 1.0 / math.sqrt(d_input)
    weight = jax.random.uniform(kw, (d_output, d_input), dtype,
                                minval=-bound, maxval=bound)
    bias = jax.random.uniform(kb, (d_output, 1), dtype,
                              minval=-bound, maxval=bound)
    return weight, bias


def _reference(x, weight, bias, compute_dtype=jnp.bfloat16):
    # Same bf16-input / f32-accumulate numerics as the kernel, in plain XLA.
    cdt = compute_dtype if compute_dtype is not None else x.dtype
    xw = x.astype(cdt).astype(jnp.float32)
    ww = weight.astype(cdt).astype(jnp.float32)
    out = jnp.einsum('...ul,vu->...vl', xw, ww,
                     precision=jax.lax.Precision.HIGHEST)
    b = bias if bias is not None else 0.0
    return (out + jnp.asarray(b, jnp.float32)).astype(x.dtype)


def _check(out, ref, atol, rtol, name):
    o = out.astype(jnp.float32)
    r = ref.astype(jnp.float32)
    err = float(jnp.max(jnp.abs(o - r)))
    assert jnp.allclose(o, r, atol=atol, rtol=rtol), (name, err)


if __name__ == "__main__":
    key = jax.random.PRNGKey(0)
    kx1, kp1, kx2, kp2, kx3, kp3 = jax.random.split(key, 6)

    # 1) Module-sized demo shapes: single grid step, resident weight,
    #    whole-U reduction (no accumulator).
    B, U, V, L = 2, 32, 64, 16
    x = jax.random.normal(kx1, (B, U, L), jnp.float32)
    weight, bias = init_params(kp1, U, V)
    out = jax.block_until_ready(transposed_linear(x, weight, bias))
    assert out.shape == (B, V, L)
    _check(out, _reference(x, weight, bias), 1e-2, 1e-2, "small")

    # 2) Leading batch dims + K tiling (f32 -> accumulate directly into the
    #    output block) + U/L padding path, resident weight.
    U2, V2, L2 = 192, 96, 320
    x2 = jax.random.normal(kx2, (2, 2, U2, L2), jnp.float32)
    w2, b2 = init_params(kp2, U2, V2)
    out2 = jax.block_until_ready(
        transposed_linear(x2, w2, b2, block_k=64, block_l=128))
    assert out2.shape == (2, 2, V2, L2)
    _check(out2, _reference(x2, w2, b2), 1e-2, 1e-2, "multi-k f32")

    # 3) bf16 output (f32 scratch accumulator) + streamed-weight fallback +
    #    V/L/U tiling with padding.
    U3, V3, L3, B3 = 272, 100, 200, 2
    x3 = jax.random.normal(kx3, (B3, U3, L3), jnp.bfloat16)
    w3, b3 = init_params(kp3, U3, V3, dtype=jnp.bfloat16)
    out3 = jax.block_until_ready(
        transposed_linear(x3, w3, b3, block_v=32, block_l=128, block_k=128,
                          max_resident_weight_bytes=0))
    assert out3.shape == (B3, V3, L3)
    _check(out3, _reference(x3, w3, b3), 3e-2, 3e-2, "bf16 scratch")

    print("KERNEL_OK")
</pallas_src>

<mosaic_0001>
module attributes {stable_mosaic.version = 11 : i64} {
  func.func @kernel(%arg0: i32, %arg1: i32, %arg2: i32, %arg3: i32, %arg4: memref<1x32x16xf32, #tpu.memory_space<vmem>>, %arg5: memref<1x1x64x32xbf16, #tpu.memory_space<vmem>>, %arg6: memref<64x1xf32, #tpu.memory_space<vmem>>, %arg7: memref<1x64x16xf32, #tpu.memory_space<vmem>>) attributes {dimension_semantics = [#tpu.dimension_semantics<parallel>, #tpu.dimension_semantics<parallel>, #tpu.dimension_semantics<parallel>, #tpu.dimension_semantics<arbitrary>], iteration_bounds = array<i64: 2, 1, 1, 1>, scalar_prefetch = 0 : i64, scratch_operands = 0 : i64, tpu.core_type = #tpu.core_type<tc>, window_params = [{transform_indices = @transform_0, window_bounds = array<i64: 1, 32, 16>}, {pipeline_mode = #tpu.pipeline_mode<synchronous>, transform_indices = @transform_1, window_bounds = array<i64: 1, 1, 64, 32>}, {transform_indices = @transform_2, window_bounds = array<i64: 64, 1>}, {transform_indices = @transform_3, window_bounds = array<i64: 1, 64, 16>}]} {
    %0 = arith.index_cast %arg2 : i32 to index
    %1 = arith.index_cast %arg3 : i32 to index
    %c0 = arith.constant 0 : index
    %c0_0 = arith.constant 0 : index
    %2 = vector.load %arg5[%0, %1, %c0, %c0_0] : memref<1x1x64x32xbf16, #tpu.memory_space<vmem>>, vector<1x1x64x32xbf16>
    %3 = vector.shape_cast %2 : vector<1x1x64x32xbf16> to vector<64x32xbf16>
    %c0_1 = arith.constant 0 : index
    %c0_2 = arith.constant 0 : index
    %c0_3 = arith.constant 0 : index
    %4 = vector.load %arg4[%c0_1, %c0_2, %c0_3] : memref<1x32x16xf32, #tpu.memory_space<vmem>>, vector<1x32x16xf32>
    %5 = vector.shape_cast %4 : vector<1x32x16xf32> to vector<32x16xf32>
    %6 = arith.truncf %5 : vector<32x16xf32> to vector<32x16xbf16>
    %cst = arith.constant dense<0.000000e+00> : vector<64x16xf32>
    %7 = tpu.matmul %3, %6, %cst {dimension_numbers = #tpu.dot_dimension_numbers<[1], [0], [0], [1], [0, 0, 1, 1], [], []>} : vector<64x32xbf16>, vector<32x16xbf16>, vector<64x16xf32> -> vector<64x16xf32>
    %c0_4 = arith.constant 0 : index
    %c0_5 = arith.constant 0 : index
    %8 = vector.load %arg6[%c0_4, %c0_5] : memref<64x1xf32, #tpu.memory_space<vmem>>, vector<64x1xf32>
    %9 = vector.broadcast %8 : vector<64x1xf32> to vector<64x16xf32>
    %10 = arith.addf %7, %9 : vector<64x16xf32>
    %c0_6 = arith.constant 0 : index
    %c0_7 = arith.constant 0 : index
    %c0_8 = arith.constant 0 : index
    %11 = vector.load %arg7[%c0_6, %c0_7, %c0_8] : memref<1x64x16xf32, #tpu.memory_space<vmem>>, vector<1x64x16xf32>
    %12 = vector.shape_cast %11 : vector<1x64x16xf32> to vector<64x16xf32>
    %13 = vector.shape_cast %10 : vector<64x16xf32> to vector<1x64x16xf32>
    tpu.vector_store %arg7[%c0_6, %c0_7, %c0_8], %13 {strides = array<i32>} : memref<1x64x16xf32, #tpu.memory_space<vmem>>, vector<1x64x16xf32>,
    return
  }
  func.func @transform_0(%arg0: i32, %arg1: i32, %arg2: i32, %arg3: i32) -> (i32, i32, i32) {
    %c0_i32 = arith.constant 0 : i32
    return %arg0, %arg3, %arg1 : i32, i32, i32
  }
  func.func @transform_1(%arg0: i32, %arg1: i32, %arg2: i32, %arg3: i32) -> (i32, i32, i32, i32) {
    %c0_i32 = arith.constant 0 : i32
    %c0_i32_0 = arith.constant 0 : i32
    %c0_i32_1 = arith.constant 0 : i32
    %c0_i32_2 = arith.constant 0 : i32
    %c0_i32_3 = arith.constant 0 : i32
    return %c0_i32, %c0_i32_0, %c0_i32_1, %c0_i32_2 : i32, i32, i32, i32
  }
  func.func @transform_2(%arg0: i32, %arg1: i32, %arg2: i32, %arg3: i32) -> (i32, i32) {
    %c0_i32 = arith.constant 0 : i32
    %c0_i32_0 = arith.constant 0 : i32
    return %arg2, %c0_i32 : i32, i32
  }
  func.func @transform_3(%arg0: i32, %arg1: i32, %arg2: i32, %arg3: i32) -> (i32, i32, i32) {
    %c0_i32 = arith.constant 0 : i32
    return %arg0, %arg2, %arg1 : i32, i32, i32
  }
}

</mosaic_0001>

<llo_original>
// kernel: tpu_custom_call.1
$region0: #{tpu_custom_call.1}
  #allocation0 [shape = 'u32[]', space=smem, size = 0x4, offset = 0x4, fixed_abs, tag = 'smem constant byte address 0x4 - core index']
  #allocation1 [shape = 'u32[144,128]{1,0:T(1,128)}', space=vmem, size = 0x12000, scoped, tag = 'internal scratch']
  %s0 = inlined_call_operand.vmem [shape: f32[2,32,16], index: 0, kind: input, shape index: {}]
  %s1 = inlined_call_operand.vmem [shape: bf16[1,1,64,32], index: 1, kind: input, shape index: {}]
  %s2 = inlined_call_operand.vmem [shape: f32[64,1], index: 2, kind: input, shape index: {}]
  %s3 = inlined_call_operand.vmem [shape: f32[2,64,16], index: 3, kind: output, shape index: {}]
  %s4 = sld [smem:[#allocation0]]
  $region45: #{tpu_custom_call.1} parent=0
    _
  %s6 = ssub.s32 1, %s4
  %s7 = scalar_select 0, %s6, %s4
  loop: start=0, step=1, limit=4
  $region2: #{tpu_custom_call.1} parent=0 // loop_pre_header
    _
  $region3: #{tpu_custom_call.1} parent=0 // loop_header
    %s9 = sphi 0, %s13
    %p10 = scmp.ge.s32.totalorder %s9, 4
    %s16 = sphi 0, %s42
    %s17 = sphi 0, %s38
    %s18 = sphi 0, %s34
    %s19 = sphi 0, %s30
    %s20 = sphi 0, %s16
    %s21 = sphi 0, %s17
    %s22 = sphi 0, %s18
    %s23 = sphi 0, %s19
    %s24 = sphi 0, %s20
    %s25 = sphi 0, %s21
    %s26 = sphi 0, %s22
    %s27 = sphi 0, %s23
    %s49 = sphi 0, %s51
    %s52 = sphi 0, %s49
    %s53 = sphi 0, %s52
    %s69 = sphi 0, %s53
    %s73 = sphi 0, %s73
    %s75 = sphi 0, %s73
    %s76 = sphi 0, %s75
    %s90 = sphi 0, %s76
    %s96 = sphi 0, %s98
    %s99 = sphi 0, %s96
    %s100 = sphi 0, %s99
    %s116 = sphi 0, %s100
    %s126 = sphi 0, %s128
    %s129 = sphi 0, %s126
    %s130 = sphi 0, %s129
    %s146 = sphi 0, %s130
  $region4: #{tpu_custom_call.1} parent=0 // loop_header_branch
    %12 = sbr.rel (%p10) target = $region8
  $region5: #{tpu_custom_call.1} parent=0 // loop_body
    %s14 = ssub.s32 %s9, 1
    %s15 = ssub.s32 %s9, 2
    %s28 = sadd.s32 1, %s19
    %p29 = scmp.ge.s32.totalorder %s28, 1
    %s30 = scalar_select %p29, 0, %s28
    %s31 = sadd.s32 1, %s18
    %s32 = scalar_select %p29, %s31, %s18
    %p33 = scmp.ge.s32.totalorder %s32, 1
    %s34 = scalar_select %p33, 0, %s32
    %s35 = sadd.s32 1, %s17
    %s36 = scalar_select %p33, %s35, %s17
    %p37 = scmp.ge.s32.totalorder %s36, 1
    %s38 = scalar_select %p37, 0, %s36
    %s39 = sadd.s32 1, %s16
    %s40 = scalar_select %p37, %s39, %s16
    %p41 = scmp.ge.s32.totalorder %s40, 2
    %s42 = scalar_select %p41, 0, %s40
    %s43 = ssub.s32 %s16, %s42
    %s44 = ssub.s32 %s19, %s30
    %s45 = sor.u32 %s43, %s44
    %s46 = ssub.s32 %s17, %s38
    %s47 = sor.u32 %s45, %s46
    %p48 = scmp.eq.s32.totalorder %s47, 0
    %s50 = sadd.s32 %s49, 1
    %s51 = scalar_select %p48, %s49, %s50
    %p54 = pneg %p48
    %p55 = scmp.eq.s32.totalorder %s9, 1
    %p56 = por %p54, %p55
    %p57 = scmp.ne.s32.totalorder %s49, %s52
    %p58 = scmp.eq.s32.totalorder %s9, 0
    %p59 = por %p57, %p58
    %p60 = scmp.ne.s32.totalorder %s49, %s52
    %p61 = scmp.eq.s32.totalorder %s14, 1
    %p62 = por %p60, %p61
    %p63 = scmp.ne.s32.totalorder %s52, %s53
    %p64 = scmp.eq.s32.totalorder %s14, 0
    %p65 = por %p63, %p64
    %p66 = scmp.ne.s32.totalorder %s52, %s53
    %p67 = scmp.eq.s32.totalorder %s15, 1
    %p68 = por %p66, %p67
    %p70 = scmp.ne.s32.totalorder %s53, %s69
    %p71 = scmp.eq.s32.totalorder %s15, 0
    %p72 = por %p70, %p71
    %s74 = sadd.s32 %s73, 1
    %p77 = scmp.eq.s32.totalorder %s9, 1
    %p78 = scmp.ne.s32.totalorder %s73, %s75
    %p79 = scmp.eq.s32.totalorder %s9, 0
    %p80 = por %p78, %p79
    %p81 = scmp.ne.s32.totalorder %s73, %s75
    %p82 = scmp.eq.s32.totalorder %s14, 1
    %p83 = por %p81, %p82
    %p84 = scmp.ne.s32.totalorder %s75, %s76
    %p85 = scmp.eq.s32.totalorder %s14, 0
    %p86 = por %p84, %p85
    %p87 = scmp.ne.s32.totalorder %s75, %s76
    %p88 = scmp.eq.s32.totalorder %s15, 1
    %p89 = por %p87, %p88
    %p91 = scmp.ne.s32.totalorder %s76, %s90
    %p92 = scmp.eq.s32.totalorder %s15, 0
    %p93 = por %p91, %p92
    %s94 = ssub.s32 %s18, %s34
    %p95 = scmp.eq.s32.totalorder %s94, 0
    %s97 = sadd.s32 %s96, 1
    %s98 = scalar_select %p95, %s96, %s97
    %p101 = pneg %p95
    %p102 = scmp.eq.s32.totalorder %s9, 1
    %p103 = por %p101, %p102
    %p104 = scmp.ne.s32.totalorder %s96, %s99
    %p105 = scmp.eq.s32.totalorder %s9, 0
    %p106 = por %p104, %p105
    %p107 = scmp.ne.s32.totalorder %s96, %s99
    %p108 = scmp.eq.s32.totalorder %s14, 1
    %p109 = por %p107, %p108
    %p110 = scmp.ne.s32.totalorder %s99, %s100
    %p111 = scmp.eq.s32.totalorder %s14, 0
    %p112 = por %p110, %p111
    %p113 = scmp.ne.s32.totalorder %s99, %s100
    %p114 = scmp.eq.s32.totalorder %s15, 1
    %p115 = por %p113, %p114
    %p117 = scmp.ne.s32.totalorder %s100, %s116
    %p118 = scmp.eq.s32.totalorder %s15, 0
    %p119 = por %p117, %p118
    %s120 = ssub.s32 %s16, %s42
    %s121 = ssub.s32 %s18, %s34
    %s122 = sor.u32 %s120, %s121
    %s123 = ssub.s32 %s17, %s38
    %s124 = sor.u32 %s122, %s123
    %p125 = scmp.eq.s32.totalorder %s124, 0
    %s127 = sadd.s32 %s126, 1
    %s128 = scalar_select %p125, %s126, %s127
    %p131 = pneg %p125
    %p132 = scmp.eq.s32.totalorder %s9, 1
    %p133 = por %p131, %p132
    %p134 = scmp.ne.s32.totalorder %s126, %s129
    %p135 = scmp.eq.s32.totalorder %s9, 0
    %p136 = por %p134, %p135
    %p137 = scmp.ne.s32.totalorder %s126, %s129
    %p138 = scmp.eq.s32.totalorder %s14, 1
    %p139 = por %p137, %p138
    %p140 = scmp.ne.s32.totalorder %s129, %s130
    %p141 = scmp.eq.s32.totalorder %s14, 0
    %p142 = por %p140, %p141
    %p143 = scmp.ne.s32.totalorder %s129, %s130
    %p144 = scmp.eq.s32.totalorder %s15, 1
    %p145 = por %p143, %p144
    %p147 = scmp.ne.s32.totalorder %s130, %s146
    %p148 = scmp.eq.s32.totalorder %s15, 0
    %p149 = por %p147, %p148
    %p150 = scmp.le.s32.totalorder 1, %s9
    %p151 = scmp.lt.s32.totalorder %s9, 3
    %p152 = pnand %p150, %p151
    %p153 = pneg %p152
    // Predicated region
    $region9: #{tpu_custom_call.1} parent=5 // pred_check
      _
    $region10: #{tpu_custom_call.1} parent=5 // pred_check_branch
      %155 = sbr.rel (%p152) target = $region12
    $region11: #{tpu_custom_call.1} parent=5 // pred_region
      %s156 = ssub.s32 %s9, 1
      // Predicated region
      $region13: #{tpu_custom_call.1} parent=11 // pred_check
        %p157 = pneg %p86
      $region14: #{tpu_custom_call.1} parent=11 // pred_check_branch
        %159 = sbr.rel (%p157) target = $region16
      $region15: #{tpu_custom_call.1} parent=11 // pred_region
        _
      $region16: #{tpu_custom_call.1} parent=11 // pred_fallthru
        _
      // Predicated region
      $region17: #{tpu_custom_call.1} parent=11 // pred_check
        %p160 = pneg %p112
      $region18: #{tpu_custom_call.1} parent=11 // pred_check_branch
        %162 = sbr.rel (%p160) target = $region20
      $region19: #{tpu_custom_call.1} parent=11 // pred_region
        %s163 = smul.u32 8, %s22
        %p164 = scmp.lt.s32.totalorder %s163, 7
        %s165 = scalar_select %p164, %s163, 7
        %s166 = smul.addr %s165, 8
        %s167 = scalar_lea.vmem %s2, %s166
        %s168 = smul.u32 8, %s22
      $region20: #{tpu_custom_call.1} parent=11 // pred_fallthru
        _
    $region12: #{tpu_custom_call.1} parent=5 // pred_fallthru
      _
    %p169 = scmp.lt.s32.totalorder %s9, 2
    // Predicated region
    $region21: #{tpu_custom_call.1} parent=5 // pred_check
      %p170 = pneg %p169
    $region22: #{tpu_custom_call.1} parent=5 // pred_check_branch
      %172 = sbr.rel (%p170) target = $region24
    $region23: #{tpu_custom_call.1} parent=5 // pred_region
      // Predicated region
      $region25: #{tpu_custom_call.1} parent=23 // pred_check
        %p173 = pneg %p59
      $region26: #{tpu_custom_call.1} parent=23 // pred_check_branch
        %175 = sbr.rel (%p173) target = $region28
      $region27: #{tpu_custom_call.1} parent=23 // pred_region
        %s176 = smul.u32 4, %s19
        %p177 = scmp.lt.s32.totalorder %s16, 1
        %s178 = scalar_select %p177, %s16, 1
        %p179 = scmp.lt.s32.totalorder %s176, 3
        %s180 = scalar_select %p179, %s176, 3
        %p181 = scmp.lt.s32.totalorder %s17, 0
        %s182 = scalar_select %p181, %s17, 0
        %s183 = sadd.s32 %s182, %s180
        %s184 = smul.addr %s178, 4
        %s185 = sadd.s32 %s183, %s184
        %s186 = smul.addr %s185, 8
        %s187 = scalar_lea.vmem %s0, %s186
        %s188 = smul.u32 4, %s19
      $region28: #{tpu_custom_call.1} parent=23 // pred_fallthru
        _
    $region24: #{tpu_custom_call.1} parent=5 // pred_fallthru
      _
    %p189 = scmp.le.s32.totalorder 1, %s9
    %p190 = scmp.lt.s32.totalorder %s9, 3
    %p191 = pnand %p189, %p190
    %p192 = pneg %p191
    // Predicated region
    $region29: #{tpu_custom_call.1} parent=5 // pred_check
      _
    $region30: #{tpu_custom_call.1} parent=5 // pred_check_branch
      %194 = sbr.rel (%p191) target = $region32
    $region31: #{tpu_custom_call.1} parent=5 // pred_region
      %s195 = ssub.s32 %s9, 1
      %s196 = smul.u32 4, %s23
      %p197 = scmp.lt.s32.totalorder %s20, 1
      %s198 = scalar_select %p197, %s20, 1
      %p199 = scmp.lt.s32.totalorder %s196, 3
      %s200 = scalar_select %p199, %s196, 3
      %p201 = scmp.lt.s32.totalorder %s21, 0
      %s202 = scalar_select %p201, %s21, 0
      %s203 = sadd.s32 %s202, %s200
      %s204 = smul.addr %s198, 4
      %s205 = sadd.s32 %s203, %s204
      %s206 = smul.addr %s205, 8
      %s207 = scalar_lea.vmem %s0, %s206
      %p208 = pneg %p65
      %p209 = pneg %p62
      %p210 = pneg %p86
      %p211 = pneg %p83
      %s212 = smul.u32 8, %s22
      %p213 = scmp.lt.s32.totalorder %s212, 7
      %s214 = scalar_select %p213, %s212, 7
      %s215 = smul.addr %s214, 8
      %s216 = scalar_lea.vmem %s2, %s215
      %p217 = pneg %p112
      %p218 = pneg %p109
      %p219 = pneg %p142
      %p220 = pneg %p139
      %s221 = smul.u32 8, %s22
      %p222 = scmp.lt.s32.totalorder %s20, 1
      %s223 = scalar_select %p222, %s20, 1
      %p224 = scmp.lt.s32.totalorder %s221, 7
      %s225 = scalar_select %p224, %s221, 7
      %p226 = scmp.lt.s32.totalorder %s21, 0
      %s227 = scalar_select %p226, %s21, 0
      %s228 = sadd.s32 %s227, %s225
      %s229 = smul.addr %s223, 8
      %s230 = sadd.s32 %s228, %s229
      %s231 = smul.addr %s230, 8
      %s232 = scalar_lea.vmem %s3, %s231
      %s233 = smul.u32 4, %s23
      %p234 = scmp.lt.s32.totalorder %s20, 1
      %s235 = scalar_select %p234, %s20, 1
      %p236 = scmp.lt.s32.totalorder %s233, 3
      %s237 = scalar_select %p236, %s233, 3
      %p238 = scmp.lt.s32.totalorder %s21, 0
      %s239 = scalar_select %p238, %s21, 0
      %s240 = sadd.s32 %s239, %s237
      %s241 = smul.addr %s235, 4
      %s242 = sadd.s32 %s240, %s241
      %s243 = smul.addr %s242, 8
      %s244 = scalar_lea.vmem %s0, %s243
      %s245 = smul.u32 4, %s23
      %s246 = smul.u32 8, %s22
      %p247 = scmp.lt.s32.totalorder %s246, 7
      %s248 = scalar_select %p247, %s246, 7
      %s249 = smul.addr %s248, 8
      %s250 = scalar_lea.vmem %s2, %s249
      %s251 = smul.u32 8, %s22
      %s252 = smul.u32 8, %s22
      %p253 = scmp.lt.s32.totalorder %s20, 1
      %s254 = scalar_select %p253, %s20, 1
      %p255 = scmp.lt.s32.totalorder %s252, 7
      %s256 = scalar_select %p255, %s252, 7
      %p257 = scmp.lt.s32.totalorder %s21, 0
      %s258 = scalar_select %p257, %s21, 0
      %s259 = sadd.s32 %s258, %s256
      %s260 = smul.addr %s254, 8
      %s261 = sadd.s32 %s259, %s260
      %s262 = smul.addr %s261, 8
      %s263 = scalar_lea.vmem %s3, %s262
      %s264 = smul.u32 8, %s22
      %s266 = smul.u32 %s23, 8
      %s267 = smul.u32 %s22, 8
      %s268 = sadd.s32 %s266, %s267
      %s269 = smul.addr %s268, 4
      %s270 = scalar_lea.vmem %s1, %s269
      %v271 = vld [vmem:[%s270] sm:$0xf]
      %v272 = vld [vmem:[%s270 + $0x4] sm:$0xf]
      %v273 = vld [vmem:[%s270 + $0x8] sm:$0xf]
      %v274 = vld [vmem:[%s270 + $0xc] sm:$0xf]
      %v275 = vld [vmem:[%s270 + $0x10] sm:$0xf]
      %v276 = vld [vmem:[%s270 + $0x14] sm:$0xf]
      %v277 = vld [vmem:[%s270 + $0x18] sm:$0xf]
      %v278 = vld [vmem:[%s270 + $0x1c] sm:$0xf]
      %v279 = vld [vmem:[%s244] sm:$0xff]
      %v280 = vld [vmem:[%s244 + $0x8] sm:$0xff]
      %v281 = vld [vmem:[%s244 + $0x10] sm:$0xff]
      %v282 = vld [vmem:[%s244 + $0x18] sm:$0xff]
      %v283 = vpack.c.bf16 %v280, %v279
      %v284 = vpack.c.bf16 %v282, %v281
      %v285 = vld [vmem:[%s250] sm:$0xff]
      %v286 = vld [vmem:[%s250 + $0x8] sm:$0xff]
      %v287 = vld [vmem:[%s250 + $0x10] sm:$0xff]
      %v288 = vld [vmem:[%s250 + $0x18] sm:$0xff]
      %v289 = vld [vmem:[%s250 + $0x20] sm:$0xff]
      %v290 = vld [vmem:[%s250 + $0x28] sm:$0xff]
      %v291 = vld [vmem:[%s250 + $0x30] sm:$0xff]
      %v292 = vld [vmem:[%s250 + $0x38] sm:$0xff]
      %294 = vset.pattern.permute.xlu0 0
      %295 = vperm.xlu0 %294, %v285
      %v296 = vpop.permute.xlu0 %295
      %299 = vset.pattern.permute.xlu0 0
      %300 = vperm.xlu0 %299, %v286
      %v301 = vpop.permute.xlu0 %300
      %304 = vset.pattern.permute.xlu0 0
      %305 = vperm.xlu0 %304, %v287
      %v306 = vpop.permute.xlu0 %305
      %309 = vset.pattern.permute.xlu0 0
      %310 = vperm.xlu0 %309, %v288
      %v311 = vpop.permute.xlu0 %310
      %314 = vset.pattern.permute.xlu0 0
      %315 = vperm.xlu0 %314, %v289
      %v316 = vpop.permute.xlu0 %315
      %319 = vset.pattern.permute.xlu0 0
      %320 = vperm.xlu0 %319, %v290
      %v321 = vpop.permute.xlu0 %320
      %324 = vset.pattern.permute.xlu0 0
      %325 = vperm.xlu0 %324, %v291
      %v326 = vpop.permute.xlu0 %325
      %329 = vset.pattern.permute.xlu0 0
      %330 = vperm.xlu0 %329, %v292
      %v331 = vpop.permute.xlu0 %330
      %v341 = vunpack.c.l.b16 %v271
      %v342 = vunpack.c.l.b16 %v272
      %v343 = vunpack.c.l.b16 %v273
      %v344 = vunpack.c.l.b16 %v274
      %v345 = vunpack.c.l.b16 %v275
      %v346 = vunpack.c.l.b16 %v276
      %v347 = vunpack.c.l.b16 %v277
      %v348 = vunpack.c.l.b16 %v278
      %v349 = vpack.c.b16 %v342, %v341
      %v350 = vpack.c.b16 %v344, %v343
      %v351 = vpack.c.b16 %v346, %v345
      %v352 = vpack.c.b16 %v348, %v347
      %vm353 = vcmask 261120
      %v355 = vsel %vm353, %v349, 0
      %v358 = vsel %vm353, %v350, 0
      %v361 = vsel %vm353, %v351, 0
      %v364 = vsel %vm353, %v352, 0
      %366 = vmatprep.subr.bf16.mxu0 0
      %367 = vmatpush1.bf16.msra.mxu0 %v283
      %368 = vmatprep.subr.bf16.mxu0 0
      %369 = vmatpush1.bf16.msra.mxu0 %v284
      %370 = vmatprep.subr.bf16.mxu0 0
      %371 = vmatpush1.bf16.msra.mxu0 0
      %372 = vmatprep.subr.bf16.mxu0 0
      %373 = vmatpush1.bf16.msra.mxu0 0
      %374 = vmatprep.subr.bf16.mxu0 0
      %375 = vmatpush1.bf16.msra.mxu0 0
      %376 = vmatprep.subr.bf16.mxu0 0
      %377 = vmatpush1.bf16.msra.mxu0 0
      %378 = vmatprep.subr.bf16.mxu0 0
      %379 = vmatpush1.bf16.msra.mxu0 0
      %380 = vmatprep.subr.bf16.mxu0 0
      %381 = vmatpush1.bf16.msra.mxu0 0
      %382 = vmatprep.subr.bf16.mxu0 0
      %383 = vmatpush1.bf16.msra.mxu0 0
      %384 = vmatprep.subr.bf16.mxu0 0
      %385 = vmatpush1.bf16.msra.mxu0 0
      %386 = vmatprep.subr.bf16.mxu0 0
      %387 = vmatpush1.bf16.msra.mxu0 0
      %388 = vmatprep.subr.bf16.mxu0 0
      %389 = vmatpush1.bf16.msra.mxu0 0
      %390 = vmatprep.subr.bf16.mxu0 0
      %391 = vmatpush1.bf16.msra.mxu0 0
      %392 = vmatprep.subr.bf16.mxu0 0
      %393 = vmatpush1.bf16.msra.mxu0 0
      %394 = vmatprep.subr.bf16.mxu0 0
      %395 = vmatpush1.bf16.msra.mxu0 0
      %396 = vmatprep.subr.bf16.mxu0 0
      %397 = vmatpush1.bf16.msra.mxu0 0
      %398 = vmatprep.mubr.bf16.mxu0 0
      %399 = vmatmul.mubr.bf16.gmra.mrb[0].mxu0 %v355
      %v400 = vpop.f32.mrb[0].mxu0
      %v401 = vadd.f32 %v296, %v400
      %v402 = vpop.f32.mrb[0].mxu0
      %v403 = vpop.f32.mrb[0].mxu0
      %v404 = vadd.f32 %v301, %v403
      %v405 = vpop.f32.mrb[0].mxu0
      %406 = vmatprep.mubr.bf16.mxu0 0
      %407 = vmatmul.mubr.bf16.gmra.mrb[0].mxu0 %v358
      %v408 = vpop.f32.mrb[0].mxu0
      %v409 = vadd.f32 %v306, %v408
      %v410 = vpop.f32.mrb[0].mxu0
      %v411 = vpop.f32.mrb[0].mxu0
      %v412 = vadd.f32 %v311, %v411
      %v413 = vpop.f32.mrb[0].mxu0
      %414 = vmatprep.mubr.bf16.mxu0 0
      %415 = vmatmul.mubr.bf16.gmra.mrb[0].mxu0 %v361
      %v416 = vpop.f32.mrb[0].mxu0
      %v417 = vadd.f32 %v316, %v416
      %v418 = vpop.f32.mrb[0].mxu0
      %v419 = vpop.f32.mrb[0].mxu0
      %v420 = vadd.f32 %v321, %v419
      %v421 = vpop.f32.mrb[0].mxu0
      %422 = vmatprep.mubr.bf16.mxu0 0
      %423 = vmatmul.mubr.bf16.gmra.mrb[0].mxu0 %v364
      %v424 = vpop.f32.mrb[0].mxu0
      %v425 = vadd.f32 %v326, %v424
      %v426 = vpop.f32.mrb[0].mxu0
      %v427 = vpop.f32.mrb[0].mxu0
      %v428 = vadd.f32 %v331, %v427
      %v429 = vpop.f32.mrb[0].mxu0
      %430 = vdwg.mxu0
      %vm431 = vcmask 130048
      %432 = vst.msk [vmem:[%s263] sm:$0xff] %vm431, %v401
      %433 = vst.msk [vmem:[%s263 + $0x8] sm:$0xff] %vm431, %v404
      %434 = vst.msk [vmem:[%s263 + $0x10] sm:$0xff] %vm431, %v409
      %435 = vst.msk [vmem:[%s263 + $0x18] sm:$0xff] %vm431, %v412
      %436 = vst.msk [vmem:[%s263 + $0x20] sm:$0xff] %vm431, %v417
      %437 = vst.msk [vmem:[%s263 + $0x28] sm:$0xff] %vm431, %v420
      %438 = vst.msk [vmem:[%s263 + $0x30] sm:$0xff] %vm431, %v425
      %439 = vst.msk [vmem:[%s263 + $0x38] sm:$0xff] %vm431, %v428
      %s440 = smul.u32 8, %s22
      %p441 = scmp.lt.s32.totalorder %s20, 1
      %s442 = scalar_select %p441, %s20, 1
      %p443 = scmp.lt.s32.totalorder %s440, 7
      %s444 = scalar_select %p443, %s440, 7
      %p445 = scmp.lt.s32.totalorder %s21, 0
      %s446 = scalar_select %p445, %s21, 0
      %s447 = sadd.s32 %s446, %s444
      %s448 = smul.addr %s442, 8
      %s449 = sadd.s32 %s447, %s448
      %s450 = smul.addr %s449, 8
      %s451 = scalar_lea.vmem %s3, %s450
      // Predicated region
      $region33: #{tpu_custom_call.1} parent=31 // pred_check
        %p452 = pneg %p139
      $region34: #{tpu_custom_call.1} parent=31 // pred_check_branch
        %454 = sbr.rel (%p452) target = $region36
      $region35: #{tpu_custom_call.1} parent=31 // pred_region
        %s455 = smul.u32 8, %s22
      $region36: #{tpu_custom_call.1} parent=31 // pred_fallthru
        _
    $region32: #{tpu_custom_call.1} parent=5 // pred_fallthru
      _
    %p456 = scmp.le.s32.totalorder 2, %s9
    // Predicated region
    $region37: #{tpu_custom_call.1} parent=5 // pred_check
      %p457 = pneg %p456
    $region38: #{tpu_custom_call.1} parent=5 // pred_check_branch
      %459 = sbr.rel (%p457) target = $region40
    $region39: #{tpu_custom_call.1} parent=5 // pred_region
      %s460 = ssub.s32 %s9, 2
      // Predicated region
      $region41: #{tpu_custom_call.1} parent=39 // pred_check
        %p461 = pneg %p145
      $region42: #{tpu_custom_call.1} parent=39 // pred_check_branch
        %463 = sbr.rel (%p461) target = $region44
      $region43: #{tpu_custom_call.1} parent=39 // pred_region
        %s464 = smul.u32 8, %s26
        %p465 = scmp.lt.s32.totalorder %s24, 1
        %s466 = scalar_select %p465, %s24, 1
        %p467 = scmp.lt.s32.totalorder %s464, 7
        %s468 = scalar_select %p467, %s464, 7
        %p469 = scmp.lt.s32.totalorder %s25, 0
        %s470 = scalar_select %p469, %s25, 0
        %s471 = sadd.s32 %s470, %s468
        %s472 = smul.addr %s466, 8
        %s473 = sadd.s32 %s471, %s472
        %s474 = smul.addr %s473, 8
        %s475 = scalar_lea.vmem %s3, %s474
      $region44: #{tpu_custom_call.1} parent=39 // pred_fallthru
        _
    $region40: #{tpu_custom_call.1} parent=5 // pred_fallthru
      _
  $region6: #{tpu_custom_call.1} parent=0 // loop_footer
    %s13 = sadd.s32 1, %s9
  $region7: #{tpu_custom_call.1} parent=0 // loop_footer_branch
    %8 = sbr.rel target = $region3
  $region8: #{tpu_custom_call.1} parent=0 // loop_exit
    _

</llo_original>
